<compile_context>
chip_gen: v5e
topology: v5e:2x2
jax: 0.10.0
libtpu: 0.0.40
codegen_flags: <defaults>
</compile_context>

<pallas_src>
import functools

import jax
import jax.numpy as jnp
from jax.experimental import pallas as pl
from jax.experimental.pallas import tpu as pltpu


def _label_smooth_ce_kernel(logits_ref, label_ref, out_ref, *,
                            lb_pos, lb_neg, ignore_index, num_classes,
                            true_b, use_mxu_rowsum):
    logits_in = logits_ref[...]                               # native dtype tile
    logits = logits_in.astype(jnp.float32)                    # mirrors .float()
    tile_b = logits.shape[0]
    label = label_ref[...]                                    # (TB, 1) int32

    ignore = label == ignore_index                            # (TB, 1) bool
    lab = jnp.where(ignore, 0, label)                         # (TB, 1)

    # Row-validity mask (batch padding): rows >= true_b contribute nothing.
    row = jax.lax.broadcasted_iota(jnp.int32, (tile_b, 1), 0)
    valid_row = (pl.program_id(0) * tile_b + row) < true_b    # (TB, 1) bool

    # log_softmax pieces; `shifted` has a single consumer (the exp).
    m = jnp.max(logits, axis=-1, keepdims=True)               # (TB, 1)
    lse = jnp.log(jnp.sum(jnp.exp(logits - m), axis=-1, keepdims=True))
    z = m + lse                                               # log-sum-exp(raw)

    # Reductions on the raw tile (no extra shifted pass).
    col = jax.lax.broadcasted_iota(jnp.int32, logits.shape, 1)
    logits_at_lab = jnp.sum(jnp.where(col == lab, logits, 0.0),
                            axis=-1, keepdims=True)           # (TB, 1)
    if use_mxu_rowsum:
        # Row sum on the (otherwise idle) MXU; lane 0 of the product.
        ones = jnp.ones((logits_in.shape[1], 128), dtype=logits_in.dtype)
        sum_logits = jnp.dot(logits_in, ones,
                             preferred_element_type=jnp.float32)[:, :1]
    else:
        sum_logits = jnp.sum(logits, axis=-1, keepdims=True)  # (TB, 1)

    sum_logs = sum_logits - num_classes * z                   # sum_c logs
    logs_at_lab = logits_at_lab - z                           # logs[label]

    # -(logs * smoothed_one_hot).sum(-1); ignored rows still contribute (label 0).
    per_row = -(lb_neg * sum_logs + (lb_pos - lb_neg) * logs_at_lab)
    per_row = jnp.where(valid_row, per_row, 0.0)              # drop padded rows

    loss_sum = jnp.sum(per_row)
    n_valid = jnp.sum(jnp.where(valid_row & (~ignore), 1.0, 0.0))

    # Per-tile partials in a lane-dense (1, 8, 128) slab:
    #   [0,0,0] = loss sum of this tile, [0,0,1] = n_valid of this tile.
    sub = jax.lax.broadcasted_iota(jnp.int32, (1, 8, 128), 1)
    lane = jax.lax.broadcasted_iota(jnp.int32, (1, 8, 128), 2)
    out_ref[...] = jnp.where((sub == 0) & (lane == 0), loss_sum,
                             jnp.where((sub == 0) & (lane == 1), n_valid, 0.0))


def _vmem_budget():
    """(per-tile footprint budget, vmem_limit_bytes) keyed on physical VMEM."""
    cap = 64 << 20
    try:
        info = pltpu.get_tpu_info()
        cap = int(getattr(info, "vmem_capacity_bytes", cap)) or cap
    except Exception:
        pass
    if cap >= (100 << 20):          # v5e / v6e: 128 MiB physical
        return 40 << 20, 96 << 20
    return 26 << 20, 48 << 20       # v7x: 64 MiB per TensorCore


def _choose_tile(B, C, itemsize, footprint_budget):
    """Pick (tile_b, padded_B).

    Footprint per row ~= C * (2*itemsize + 8): double-buffered input tile plus
    ~2x f32 intermediates.  Row granularity follows dtype sublane packing.
    """
    row_gran = max(8, 32 // max(1, itemsize))        # 8 f32 / 16 bf16 / 32 int8
    bytes_per_row = C * (2 * itemsize + 8)
    tile_b = max(row_gran, footprint_budget // max(1, bytes_per_row))
    tile_b = (tile_b // row_gran) * row_gran
    padded_b_min = pl.cdiv(B, row_gran) * row_gran
    tile_b = min(tile_b, padded_b_min)
    # Megacore (v7x): prefer >= 2 grid steps whenever the batch allows it.
    while tile_b > row_gran and pl.cdiv(B, tile_b) < 2:
        tile_b = max(row_gran, ((tile_b // 2) // row_gran) * row_gran)
    padded_B = pl.cdiv(B, tile_b) * tile_b
    return tile_b, padded_B


def label_smooth_ce(logits, label, *, lb_smooth=0.1, ignore_index=-100,
                    reduction="mean", tile_b=None, use_mxu_rowsum=False):
    """Pallas implementation of LabelSmoothCE (default path, 2-D logits)."""
    assert logits.ndim == 2 and label.ndim == 1
    B, C = logits.shape
    itemsize = jnp.dtype(logits.dtype).itemsize
    footprint_budget, vmem_limit = _vmem_budget()

    if tile_b is None:
        tile_b, padded_B = _choose_tile(B, C, itemsize, footprint_budget)
    else:
        assert tile_b % 8 == 0, tile_b
        padded_B = pl.cdiv(B, tile_b) * tile_b
    num_tiles = padded_B // tile_b

    lb_pos = float(1.0 - lb_smooth)
    lb_neg = float(lb_smooth / (C - 1))

    label2d = label.astype(jnp.int32).reshape(B, 1)
    if padded_B != B:
        logits = jnp.pad(logits, ((0, padded_B - B), (0, 0)))
        label2d = jnp.pad(label2d, ((0, padded_B - B), (0, 0)),
                          constant_values=int(ignore_index))

    kernel = functools.partial(
        _label_smooth_ce_kernel,
        lb_pos=lb_pos,                      # Python scalars => compile-time
        lb_neg=lb_neg,                      # constants, no captured tracers.
        ignore_index=int(ignore_index),
        num_classes=float(C),
        true_b=int(B),
        use_mxu_rowsum=bool(use_mxu_rowsum),
    )

    cost = pl.CostEstimate(
        flops=8 * padded_B * C,
        transcendentals=padded_B * C,
        bytes_accessed=padded_B * C * itemsize + padded_B * 4
                       + num_tiles * 8 * 128 * 4,
    )

    partials = pl.pallas_call(
        kernel,
        out_shape=jax.ShapeDtypeStruct((num_tiles, 8, 128), jnp.float32),
        grid_spec=pltpu.PrefetchScalarGridSpec(
            num_scalar_prefetch=0,
            grid=(num_tiles,),
            in_specs=[
                pl.BlockSpec((tile_b, C), lambda i: (i, 0)),
                pl.BlockSpec((tile_b, 1), lambda i: (i, 0)),
            ],
            out_specs=pl.BlockSpec((1, 8, 128), lambda i: (i, 0, 0)),
        ),
        compiler_params=pltpu.CompilerParams(
            dimension_semantics=("parallel",),   # independent tiles: megacore
            vmem_limit_bytes=vmem_limit,
        ),
        cost_estimate=cost,
    )(logits, label2d)

    loss_sum = jnp.sum(partials[:, 0, 0])
    n_valid = jnp.sum(partials[:, 0, 1])

    if reduction == "mean":
        return loss_sum / n_valid           # matches PyTorch (inf/nan if n_valid==0)
    if reduction == "sum":
        return loss_sum
    # TODO(synk): reduction='none' (per-row losses) not implemented in this kernel.
    raise NotImplementedError(reduction)


def _reference(logits, label, *, lb_smooth=0.1, ignore_index=-100,
               reduction="mean"):
    """Plain-JAX mirror of the PyTorch code for verification."""
    logits = logits.astype(jnp.float32)
    B, C = logits.shape
    ignore = label == ignore_index
    n_valid = jnp.sum(~ignore)
    lab = jnp.where(ignore, 0, label)
    lb_pos, lb_neg = 1.0 - lb_smooth, lb_smooth / (C - 1)
    one_hot = jnp.full((B, C), lb_neg, jnp.float32)
    one_hot = one_hot.at[jnp.arange(B), lab].set(lb_pos)
    logs = jax.nn.log_softmax(logits, axis=-1)
    loss = -jnp.sum(logs * one_hot, axis=-1)
    if reduction == "mean":
        return loss.sum() / n_valid
    return loss.sum()


if __name__ == "__main__":
    key = jax.random.PRNGKey(0)
    k1, k2, k3, k4 = jax.random.split(key, 4)

    # --- small canonical case: B=16, C=32, f32 -------------------------------
    B, C = 16, 32
    logits_f32 = jax.random.normal(k1, (B, C), dtype=jnp.float32)
    label = jax.random.randint(k2, (B,), 0, C, dtype=jnp.int32)
    label = label.at[3].set(-100)           # exercise ignore_index path

    ref = _reference(logits_f32, label)

    # 1) auto tile selection (splits into >=2 tiles for megacore)
    loss = jax.block_until_ready(label_smooth_ce(logits_f32, label))
    assert jnp.allclose(loss, ref, rtol=1e-5, atol=1e-5), (loss, ref)

    # 2) explicit multi-tile grid
    loss_t = jax.block_until_ready(label_smooth_ce(logits_f32, label, tile_b=8))
    assert jnp.allclose(loss_t, ref, rtol=1e-5, atol=1e-5), (loss_t, ref)

    # 3) reduction='sum'
    ref_sum = _reference(logits_f32, label, reduction="sum")
    loss_s = jax.block_until_ready(
        label_smooth_ce(logits_f32, label, reduction="sum"))
    assert jnp.allclose(loss_s, ref_sum, rtol=1e-5, atol=1e-5), (loss_s, ref_sum)

    # 4) bf16 logits fed directly (no wrapper upcast / HBM copy)
    logits_bf16 = logits_f32.astype(jnp.bfloat16)
    ref_bf16 = _reference(logits_bf16, label)
    loss_b = jax.block_until_ready(label_smooth_ce(logits_bf16, label))
    assert jnp.allclose(loss_b, ref_bf16, rtol=1e-3, atol=1e-3), (loss_b, ref_bf16)

    # 5) bf16 + MXU row-sum offload (v7x-oriented option)
    loss_m = jax.block_until_ready(
        label_smooth_ce(logits_bf16, label, use_mxu_rowsum=True))
    assert jnp.allclose(loss_m, ref_bf16, rtol=1e-3, atol=1e-3), (loss_m, ref_bf16)

    # 6) ragged batch (B not a multiple of 8) + C not a multiple of 128:
    #    exercises the padding + row-mask path and lane-padded full-C blocks.
    B2, C2 = 13, 100
    logits2 = jax.random.normal(k3, (B2, C2), dtype=jnp.float32)
    label2 = jax.random.randint(k4, (B2,), 0, C2, dtype=jnp.int32)
    label2 = label2.at[0].set(-100)
    ref2 = _reference(logits2, label2)
    loss2 = jax.block_until_ready(label_smooth_ce(logits2, label2))
    assert jnp.allclose(loss2, ref2, rtol=1e-5, atol=1e-5), (loss2, ref2)

    print("KERNEL_OK")
</pallas_src>

<mosaic_0001>
module attributes {stable_mosaic.version = 11 : i64} {
  func.func @_label_smooth_ce_kernel(%arg0: i32, %arg1: memref<8x32xf32, #tpu.memory_space<vmem>>, %arg2: memref<8x1xi32, #tpu.memory_space<vmem>>, %arg3: memref<1x8x128xf32, #tpu.memory_space<vmem>>) attributes {dimension_semantics = [#tpu.dimension_semantics<parallel>], iteration_bounds = array<i64: 2>, scalar_prefetch = 0 : i64, scratch_operands = 0 : i64, tpu.core_type = #tpu.core_type<tc>, window_params = [{transform_indices = @transform_0, window_bounds = array<i64: 8, 32>}, {transform_indices = @transform_1, window_bounds = array<i64: 8, 1>}, {transform_indices = @transform_2, window_bounds = array<i64: 1, 8, 128>}]} {
    %c0 = arith.constant 0 : index
    %c0_0 = arith.constant 0 : index
    %0 = vector.load %arg1[%c0, %c0_0] : memref<8x32xf32, #tpu.memory_space<vmem>>, vector<8x32xf32>
    %c0_1 = arith.constant 0 : index
    %c0_2 = arith.constant 0 : index
    %1 = vector.load %arg2[%c0_1, %c0_2] : memref<8x1xi32, #tpu.memory_space<vmem>>, vector<8x1xi32>
    %c-100_i32 = arith.constant -100 : i32
    %2 = vector.broadcast %c-100_i32 : i32 to vector<8x1xi32>
    %3 = arith.cmpi eq, %1, %2 : vector<8x1xi32>
    %c0_i32 = arith.constant 0 : i32
    %4 = vector.broadcast %c0_i32 : i32 to vector<8x1xi32>
    %5 = arith.select %3, %4, %1 : vector<8x1xi1>, vector<8x1xi32>
    %6 = tpu.iota {dimensions = array<i32: 0>} : vector<8x1xi32>
    %c8_i32 = arith.constant 8 : i32
    %7 = arith.muli %arg0, %c8_i32 : i32
    %8 = vector.broadcast %7 : i32 to vector<8x1xi32>
    %9 = arith.addi %8, %6 : vector<8x1xi32>
    %c16_i32 = arith.constant 16 : i32
    %10 = vector.broadcast %c16_i32 : i32 to vector<8x1xi32>
    %11 = arith.cmpi slt, %9, %10 : vector<8x1xi32>
    %cst = arith.constant dense<0xFF800000> : vector<8xf32>
    %12 = vector.multi_reduction <maximumf>, %0, %cst [1] : vector<8x32xf32> to vector<8xf32>
    %13 = vector.shape_cast %12 : vector<8xf32> to vector<8x1xf32>
    %14 = vector.broadcast %13 : vector<8x1xf32> to vector<8x32xf32>
    %15 = arith.subf %0, %14 : vector<8x32xf32>
    %16 = math.exp %15 : vector<8x32xf32>
    %cst_3 = arith.constant dense<0.000000e+00> : vector<8xf32>
    %17 = vector.multi_reduction <add>, %16, %cst_3 [1] : vector<8x32xf32> to vector<8xf32>
    %18 = vector.shape_cast %17 : vector<8xf32> to vector<8x1xf32>
    %19 = math.log %18 : vector<8x1xf32>
    %20 = arith.addf %13, %19 : vector<8x1xf32>
    %21 = tpu.iota {dimensions = array<i32: 1>} : vector<8x32xi32>
    %22 = vector.broadcast %5 : vector<8x1xi32> to vector<8x32xi32>
    %23 = arith.cmpi eq, %21, %22 : vector<8x32xi32>
    %cst_4 = arith.constant 0.000000e+00 : f32
    %24 = vector.broadcast %cst_4 : f32 to vector<8x32xf32>
    %25 = arith.select %23, %0, %24 : vector<8x32xi1>, vector<8x32xf32>
    %cst_5 = arith.constant dense<0.000000e+00> : vector<8xf32>
    %26 = vector.multi_reduction <add>, %25, %cst_5 [1] : vector<8x32xf32> to vector<8xf32>
    %27 = vector.shape_cast %26 : vector<8xf32> to vector<8x1xf32>
    %cst_6 = arith.constant dense<0.000000e+00> : vector<8xf32>
    %28 = vector.multi_reduction <add>, %0, %cst_6 [1] : vector<8x32xf32> to vector<8xf32>
    %29 = vector.shape_cast %28 : vector<8xf32> to vector<8x1xf32>
    %cst_7 = arith.constant 3.200000e+01 : f32
    %30 = vector.broadcast %cst_7 : f32 to vector<8x1xf32>
    %31 = arith.mulf %30, %20 : vector<8x1xf32>
    %32 = arith.subf %29, %31 : vector<8x1xf32>
    %33 = arith.subf %27, %20 : vector<8x1xf32>
    %cst_8 = arith.constant 0.0032258064 : f32
    %34 = vector.broadcast %cst_8 : f32 to vector<8x1xf32>
    %35 = arith.mulf %34, %32 : vector<8x1xf32>
    %cst_9 = arith.constant 0.896774172 : f32
    %36 = vector.broadcast %cst_9 : f32 to vector<8x1xf32>
    %37 = arith.mulf %36, %33 : vector<8x1xf32>
    %38 = arith.addf %35, %37 : vector<8x1xf32>
    %cst_10 = arith.constant 0.000000e+00 : f32
    %39 = vector.broadcast %cst_10 : f32 to vector<8x1xf32>
    %40 = arith.subf %39, %38 : vector<8x1xf32>
    %cst_11 = arith.constant 0.000000e+00 : f32
    %41 = vector.broadcast %cst_11 : f32 to vector<8x1xf32>
    %42 = arith.select %11, %40, %41 : vector<8x1xi1>, vector<8x1xf32>
    %43 = vector.shape_cast %42 : vector<8x1xf32> to vector<1x8x1xf32>
    %cst_12 = arith.constant dense<0.000000e+00> : vector<1xf32>
    %44 = vector.multi_reduction <add>, %43, %cst_12 [1, 2] : vector<1x8x1xf32> to vector<1xf32>
    %45 = vector.shape_cast %44 : vector<1xf32> to vector<1x1x1xf32>
    %46 = vector.extract %45[0, 0, 0] : f32 from vector<1x1x1xf32>
    %cst_13 = arith.constant dense<true> : vector<8x1xi1>
    %47 = arith.xori %3, %cst_13 : vector<8x1xi1>
    %48 = arith.andi %11, %47 : vector<8x1xi1>
    %cst_14 = arith.constant 1.000000e+00 : f32
    %cst_15 = arith.constant 0.000000e+00 : f32
    %49 = vector.broadcast %cst_14 : f32 to vector<8x1xf32>
    %50 = vector.broadcast %cst_15 : f32 to vector<8x1xf32>
    %51 = arith.select %48, %49, %50 : vector<8x1xi1>, vector<8x1xf32>
    %52 = vector.shape_cast %51 : vector<8x1xf32> to vector<1x8x1xf32>
    %cst_16 = arith.constant dense<0.000000e+00> : vector<1xf32>
    %53 = vector.multi_reduction <add>, %52, %cst_16 [1, 2] : vector<1x8x1xf32> to vector<1xf32>
    %54 = vector.shape_cast %53 : vector<1xf32> to vector<1x1x1xf32>
    %55 = vector.extract %54[0, 0, 0] : f32 from vector<1x1x1xf32>
    %56 = tpu.iota {dimensions = array<i32: 1>} : vector<1x8x128xi32>
    %57 = tpu.iota {dimensions = array<i32: 2>} : vector<1x8x128xi32>
    %c0_i32_17 = arith.constant 0 : i32
    %58 = vector.broadcast %c0_i32_17 : i32 to vector<1x8x128xi32>
    %59 = arith.cmpi eq, %56, %58 : vector<1x8x128xi32>
    %c0_i32_18 = arith.constant 0 : i32
    %60 = vector.broadcast %c0_i32_18 : i32 to vector<1x8x128xi32>
    %61 = arith.cmpi eq, %57, %60 : vector<1x8x128xi32>
    %62 = arith.andi %59, %61 : vector<1x8x128xi1>
    %c0_i32_19 = arith.constant 0 : i32
    %63 = vector.broadcast %c0_i32_19 : i32 to vector<1x8x128xi32>
    %64 = arith.cmpi eq, %56, %63 : vector<1x8x128xi32>
    %c1_i32 = arith.constant 1 : i32
    %65 = vector.broadcast %c1_i32 : i32 to vector<1x8x128xi32>
    %66 = arith.cmpi eq, %57, %65 : vector<1x8x128xi32>
    %67 = arith.andi %64, %66 : vector<1x8x128xi1>
    %cst_20 = arith.constant 0.000000e+00 : f32
    %68 = vector.broadcast %55 : f32 to vector<1x8x128xf32>
    %69 = vector.broadcast %cst_20 : f32 to vector<1x8x128xf32>
    %70 = arith.select %67, %68, %69 : vector<1x8x128xi1>, vector<1x8x128xf32>
    %71 = vector.broadcast %46 : f32 to vector<1x8x128xf32>
    %72 = arith.select %62, %71, %70 : vector<1x8x128xi1>, vector<1x8x128xf32>
    %c0_21 = arith.constant 0 : index
    %c0_22 = arith.constant 0 : index
    %c0_23 = arith.constant 0 : index
    %73 = vector.load %arg3[%c0_21, %c0_22, %c0_23] : memref<1x8x128xf32, #tpu.memory_space<vmem>>, vector<1x8x128xf32>
    tpu.vector_store %arg3[%c0_21, %c0_22, %c0_23], %72 {strides = array<i32>} : memref<1x8x128xf32, #tpu.memory_space<vmem>>, vector<1x8x128xf32>,
    return
  }
  func.func @transform_0(%arg0: i32) -> (i32, i32) {
    %c0_i32 = arith.constant 0 : i32
    %c0_i32_0 = arith.constant 0 : i32
    return %arg0, %c0_i32 : i32, i32
  }
  func.func @transform_1(%arg0: i32) -> (i32, i32) {
    %c0_i32 = arith.constant 0 : i32
    %c0_i32_0 = arith.constant 0 : i32
    return %arg0, %c0_i32 : i32, i32
  }
  func.func @transform_2(%arg0: i32) -> (i32, i32, i32) {
    %c0_i32 = arith.constant 0 : i32
    %c0_i32_0 = arith.constant 0 : i32
    %c0_i32_1 = arith.constant 0 : i32
    return %arg0, %c0_i32, %c0_i32_0 : i32, i32, i32
  }
}

</mosaic_0001>

<llo_original>
// kernel: tpu_custom_call.1
$region0: #{tpu_custom_call.1}
  #allocation0 [shape = 'u32[]', space=smem, size = 0x4, offset = 0x4, fixed_abs, tag = 'smem constant byte address 0x4 - core index']
  #allocation1 [shape = 'u32[72,128]{1,0:T(1,128)}', space=vmem, size = 0x9000, scoped, tag = 'internal scratch']
  %s0 = inlined_call_operand.vmem [shape: f32[16,32], index: 0, kind: input, shape index: {}]
  %s1 = inlined_call_operand.vmem [shape: s32[16,1], index: 1, kind: input, shape index: {}]
  %s2 = inlined_call_operand.hbm [shape: f32[2,8,128], index: 2, kind: output, shape index: {}]
  %s3 = sld [smem:[#allocation0]]
  $region41: #{tpu_custom_call.1} parent=0
    _
  %s5 = ssub.s32 1, %s3
  %s6 = scalar_select 0, %s5, %s3
  $region1: #{tpu_custom_call.1} parent=0
    #allocation2 [shape = 'u8[8192]{0}', space=vmem, size = 0x2000, scoped, tag = 'output window, operand 0']
    #allocation3 [shape = 's32[2]{0}', space=sflag, size = 0x8, scoped, tag = 'scoped memory for tpu_custom_call.1']
    %7 = vsyncpa [#allocation3], 0
    %s8 = scalar_lea.sflag [#allocation3], 1
    %9 = vsyncpa %s8, 0
    loop: start=0, step=1, limit=4
    $region2: #{tpu_custom_call.1} parent=1 // loop_pre_header
      _
    $region3: #{tpu_custom_call.1} parent=1 // loop_header
      %s11 = sphi 0, %s15
      %p12 = scmp.ge.s32.totalorder %s11, 4
      %s21 = sphi 0, %s23
      %s24 = sphi 0, %s21
      %s25 = sphi 0, %s24
      %s41 = sphi 0, %s25
      %s47 = sphi 0, %s49
      %s50 = sphi 0, %s47
      %s51 = sphi 0, %s50
      %s67 = sphi 0, %s51
      %s73 = sphi 0, %s75
      %s76 = sphi 0, %s73
      %s77 = sphi 0, %s76
      %s93 = sphi 0, %s77
    $region4: #{tpu_custom_call.1} parent=1 // loop_header_branch
      %14 = sbr.rel (%p12) target = $region8
    $region5: #{tpu_custom_call.1} parent=1 // loop_body
      %s16 = ssub.s32 %s11, 1
      %s17 = ssub.s32 %s11, 2
      %s18 = sadd.s32 %s11, 1
      %s19 = ssub.s32 %s11, %s18
      %p20 = scmp.eq.s32.totalorder %s19, 0
      %s22 = sadd.s32 %s21, 1
      %s23 = scalar_select %p20, %s21, %s22
      %p26 = pneg %p20
      %p27 = scmp.eq.s32.totalorder %s11, 1
      %p28 = por %p26, %p27
      %p29 = scmp.ne.s32.totalorder %s21, %s24
      %p30 = scmp.eq.s32.totalorder %s11, 0
      %p31 = por %p29, %p30
      %p32 = scmp.ne.s32.totalorder %s21, %s24
      %p33 = scmp.eq.s32.totalorder %s16, 1
      %p34 = por %p32, %p33
      %p35 = scmp.ne.s32.totalorder %s24, %s25
      %p36 = scmp.eq.s32.totalorder %s16, 0
      %p37 = por %p35, %p36
      %p38 = scmp.ne.s32.totalorder %s24, %s25
      %p39 = scmp.eq.s32.totalorder %s17, 1
      %p40 = por %p38, %p39
      %p42 = scmp.ne.s32.totalorder %s25, %s41
      %p43 = scmp.eq.s32.totalorder %s17, 0
      %p44 = por %p42, %p43
      %s45 = ssub.s32 %s11, %s18
      %p46 = scmp.eq.s32.totalorder %s45, 0
      %s48 = sadd.s32 %s47, 1
      %s49 = scalar_select %p46, %s47, %s48
      %p52 = pneg %p46
      %p53 = scmp.eq.s32.totalorder %s11, 1
      %p54 = por %p52, %p53
      %p55 = scmp.ne.s32.totalorder %s47, %s50
      %p56 = scmp.eq.s32.totalorder %s11, 0
      %p57 = por %p55, %p56
      %p58 = scmp.ne.s32.totalorder %s47, %s50
      %p59 = scmp.eq.s32.totalorder %s16, 1
      %p60 = por %p58, %p59
      %p61 = scmp.ne.s32.totalorder %s50, %s51
      %p62 = scmp.eq.s32.totalorder %s16, 0
      %p63 = por %p61, %p62
      %p64 = scmp.ne.s32.totalorder %s50, %s51
      %p65 = scmp.eq.s32.totalorder %s17, 1
      %p66 = por %p64, %p65
      %p68 = scmp.ne.s32.totalorder %s51, %s67
      %p69 = scmp.eq.s32.totalorder %s17, 0
      %p70 = por %p68, %p69
      %s71 = ssub.s32 %s11, %s18
      %p72 = scmp.eq.s32.totalorder %s71, 0
      %s74 = sadd.s32 %s73, 1
      %s75 = scalar_select %p72, %s73, %s74
      %p78 = pneg %p72
      %p79 = scmp.eq.s32.totalorder %s11, 1
      %p80 = por %p78, %p79
      %p81 = scmp.ne.s32.totalorder %s73, %s76
      %p82 = scmp.eq.s32.totalorder %s11, 0
      %p83 = por %p81, %p82
      %p84 = scmp.ne.s32.totalorder %s73, %s76
      %p85 = scmp.eq.s32.totalorder %s16, 1
      %p86 = por %p84, %p85
      %p87 = scmp.ne.s32.totalorder %s76, %s77
      %p88 = scmp.eq.s32.totalorder %s16, 0
      %p89 = por %p87, %p88
      %p90 = scmp.ne.s32.totalorder %s76, %s77
      %p91 = scmp.eq.s32.totalorder %s17, 1
      %p92 = por %p90, %p91
      %p94 = scmp.ne.s32.totalorder %s77, %s93
      %p95 = scmp.eq.s32.totalorder %s17, 0
      %p96 = por %p94, %p95
      %p97 = scmp.le.s32.totalorder 1, %s11
      %p98 = scmp.lt.s32.totalorder %s11, 3
      %p99 = pnand %p97, %p98
      %p100 = pneg %p99
      // Predicated region
      $region9: #{tpu_custom_call.1} parent=5 // pred_check
        _
      $region10: #{tpu_custom_call.1} parent=5 // pred_check_branch
        %102 = sbr.rel (%p99) target = $region12
      $region11: #{tpu_custom_call.1} parent=5 // pred_region
        %s103 = ssub.s32 %s11, 1
      $region12: #{tpu_custom_call.1} parent=5 // pred_fallthru
        _
      %p104 = scmp.lt.s32.totalorder %s11, 2
      // Predicated region
      $region13: #{tpu_custom_call.1} parent=5 // pred_check
        %p105 = pneg %p104
      $region14: #{tpu_custom_call.1} parent=5 // pred_check_branch
        %107 = sbr.rel (%p105) target = $region16
      $region15: #{tpu_custom_call.1} parent=5 // pred_region
        // Predicated region
        $region17: #{tpu_custom_call.1} parent=15 // pred_check
          %p108 = pneg %p31
        $region18: #{tpu_custom_call.1} parent=15 // pred_check_branch
          %110 = sbr.rel (%p108) target = $region20
        $region19: #{tpu_custom_call.1} parent=15 // pred_region
          %p111 = scmp.lt.s32.totalorder %s11, 1
          %s112 = scalar_select %p111, %s11, 1
          %s113 = smul.addr %s112, 8
          %s114 = scalar_lea.vmem %s0, %s113
        $region20: #{tpu_custom_call.1} parent=15 // pred_fallthru
          _
        // Predicated region
        $region21: #{tpu_custom_call.1} parent=15 // pred_check
          %p115 = pneg %p57
        $region22: #{tpu_custom_call.1} parent=15 // pred_check_branch
          %117 = sbr.rel (%p115) target = $region24
        $region23: #{tpu_custom_call.1} parent=15 // pred_region
          %p118 = scmp.lt.s32.totalorder %s11, 1
          %s119 = scalar_select %p118, %s11, 1
          %s120 = smul.addr %s119, 8
          %s121 = scalar_lea.vmem %s1, %s120
        $region24: #{tpu_custom_call.1} parent=15 // pred_fallthru
          _
      $region16: #{tpu_custom_call.1} parent=5 // pred_fallthru
        _
      %p122 = scmp.le.s32.totalorder 1, %s11
      %p123 = scmp.lt.s32.totalorder %s11, 3
      %p124 = pnand %p122, %p123
      %p125 = pneg %p124
      // Predicated region
      $region25: #{tpu_custom_call.1} parent=5 // pred_check
        _
      $region26: #{tpu_custom_call.1} parent=5 // pred_check_branch
        %127 = sbr.rel (%p124) target = $region28
      $region27: #{tpu_custom_call.1} parent=5 // pred_region
        %s128 = ssub.s32 %s11, 1
        %p129 = scmp.lt.s32.totalorder %s16, 1
        %s130 = scalar_select %p129, %s16, 1
        %s131 = smul.addr %s130, 8
        %s132 = scalar_lea.vmem %s0, %s131
        %p133 = pneg %p37
        %p134 = pneg %p34
        %p135 = scmp.lt.s32.totalorder %s16, 1
        %s136 = scalar_select %p135, %s16, 1
        %s137 = smul.addr %s136, 8
        %s138 = scalar_lea.vmem %s1, %s137
        %p139 = pneg %p63
        %p140 = pneg %p60
        %p141 = pneg %p89
        %p142 = pneg %p86
        %s143 = sand.u32 %s76, 1
        %s144 = scalar_lea.sflag [#allocation3], %s143
        %s145 = sand.u32 %s76, 1
        %s146 = smul.addr %s145, 8
        %s147 = scalar_lea.vmem [#allocation2], %s146
        %p148 = scmp.lt.s32.totalorder %s16, 1
        %s149 = scalar_select %p148, %s16, 1
        %s150 = smul.addr %s149, 8
        %s151 = scalar_lea.vmem %s0, %s150
        %p152 = scmp.lt.s32.totalorder %s16, 1
        %s153 = scalar_select %p152, %s16, 1
        %s154 = smul.addr %s153, 8
        %s155 = scalar_lea.vmem %s1, %s154
        %v156 = vld [vmem:[%s151] sm:$0xff]
        %v157 = vld [vmem:[%s155] sm:$0xff]
        %vm158 = vcmp.eq.s32.totalorder %v157, 4294967196
        %v159 = vsel %vm158, 0, %v157
        %v160 = vlaneseq
        %v161 = vshrl.u32 %v160, 7
        %s162 = smul.u32 %s16, 8
        %v163 = vstv %s162
        %v164 = vadd.s32 %v163, %v161
        %vm165 = vcmp.lt.s32.totalorder %v164, 16
        %vm166 = vcmask 261120
        %v167 = vsel %vm166, %v156, -inf
        %168 = vmax.xlane.f32.xlu0 %v167
        %v169 = vpop.xlane.xlu0 %168
        %v170 = vsub.f32 %v156, %v169
        %v171 = vmul.f32 %v170, 1.442695
        %v172 = vpow.pop %v171
        %v173 = vsel %vm166, %v172, 0.0
        %174 = vadd.xlane.f32.xlu0 %v173
        %v175 = vpop.xlane.xlu0 %174
        %v176 = vlog2.pop %v175
        %v177 = vmul.f32 %v176, 0.6931472
        %v178 = vadd.f32 %v169, %v177
        %v179 = vlaneseq
        %v180 = vand.u32 %v179, 127
        %181 = vset.pattern.permute.xlu0 0
        %182 = vperm.xlu0 %181, %v159
        %v183 = vpop.permute.xlu0 %182
        %vm184 = vcmp.eq.s32.totalorder %v180, %v183
        %v185 = vsel %vm184, %v156, 0.0
        %v186 = vsel %vm166, %v185, 0.0
        %187 = vadd.xlane.f32.xlu0 %v186
        %v188 = vpop.xlane.xlu0 %187
        %v189 = vsel %vm166, %v156, 0.0
        %190 = vadd.xlane.f32.xlu0 %v189
        %v191 = vpop.xlane.xlu0 %190
        %v192 = vmul.f32 %v178, 32.0
        %v193 = vsub.f32 %v191, %v192
        %v194 = vsub.f32 %v188, %v178
        %v195 = vmul.f32 %v193, 0.0032258064
        %v196 = vmul.f32 %v194, 0.8967742
        %v197 = vadd.f32 %v195, %v196
        %v198 = vsub.f32 0.0, %v197
        %v199 = vsel %vm165, %v198, 0.0
        %vm200 = vcmask 7168
        %v201 = vsel %vm200, %v199, 0.0
        %202 = vadd.xlane.f32.xlu0 %v201
        %v203 = vpop.xlane.xlu0 %202
        %v204 = vrot.slane %v203, 4
        %v205 = vadd.f32 %v203, %v204
        %v206 = vrot.slane %v205, 2
        %v207 = vadd.f32 %v205, %v206
        %v208 = vrot.slane %v207, 1
        %v209 = vadd.f32 %v207, %v208
        %s210 = vtos %v209
        %vm211 = vmxor %vm158, 1
        %vm212 = vmand %vm165, %vm211
        %v213 = vsel %vm212, 1.0, 0.0
        %v214 = vsel %vm200, %v213, 0.0
        %215 = vadd.xlane.f32.xlu0 %v214
        %v216 = vpop.xlane.xlu0 %215
        %v217 = vrot.slane %v216, 4
        %v218 = vadd.f32 %v216, %v217
        %v219 = vrot.slane %v218, 2
        %v220 = vadd.f32 %v218, %v219
        %v221 = vrot.slane %v220, 1
        %v222 = vadd.f32 %v220, %v221
        %s223 = vtos %v222
        %vm224 = vcmp.eq.s32.totalorder %v161, 0
        %vm225 = vcmp.eq.s32.totalorder %v180, 0
        %vm226 = vmand %vm224, %vm225
        %vm227 = vcmp.eq.s32.totalorder %v180, 1
        %vm228 = vmand %vm224, %vm227
        %v229 = vstv %s223
        %v230 = vsel %vm228, %v229, 0.0
        %v231 = vstv %s210
        %v232 = vsel %vm226, %v231, %v230
        %233 = vst [vmem:[%s147] sm:$0xff] %v232
        %s234 = sand.u32 %s76, 1
        %s235 = scalar_lea.sflag [#allocation3], %s234
        %s236 = sand.u32 %s76, 1
        %s237 = smul.addr %s236, 8
        %s238 = scalar_lea.vmem [#allocation2], %s237
        // Predicated region
        $region29: #{tpu_custom_call.1} parent=27 // pred_check
          %p239 = pneg %p86
        $region30: #{tpu_custom_call.1} parent=27 // pred_check_branch
          %241 = sbr.rel (%p239) target = $region32
        $region31: #{tpu_custom_call.1} parent=27 // pred_region
          %243 = vsyncadd %s235, 0
          %s244 = smul.addr %s16, 8
          %s245 = scalar_lea.hbm %s2, %s244
          %s247 = sshll.u32 %s238, 4
          %s248 = int_to_ptr.vmem [resolvable:$true] %s247
          %s249 = sshll.u32 %s245, 4
          %s250 = int_to_ptr.hbm [resolvable:$true] %s249
          %252 = dma.vmem_to_hbm [thread:$0]  %s248, 128, %s250, %s235
        $region32: #{tpu_custom_call.1} parent=27 // pred_fallthru
          _
      $region28: #{tpu_custom_call.1} parent=5 // pred_fallthru
        _
      %p253 = scmp.le.s32.totalorder 2, %s11
      // Predicated region
      $region33: #{tpu_custom_call.1} parent=5 // pred_check
        %p254 = pneg %p253
      $region34: #{tpu_custom_call.1} parent=5 // pred_check_branch
        %256 = sbr.rel (%p254) target = $region36
      $region35: #{tpu_custom_call.1} parent=5 // pred_region
        %s257 = ssub.s32 %s11, 2
        // Predicated region
        $region37: #{tpu_custom_call.1} parent=35 // pred_check
          %p258 = pneg %p92
        $region38: #{tpu_custom_call.1} parent=35 // pred_check_branch
          %260 = sbr.rel (%p258) target = $region40
        $region39: #{tpu_custom_call.1} parent=35 // pred_region
          %s261 = sand.u32 %s77, 1
          %s262 = scalar_lea.sflag [#allocation3], %s261
          %s263 = sand.u32 %s77, 1
          %s264 = smul.addr %s263, 8
          %s265 = scalar_lea.vmem [#allocation2], %s264
          %267 = dma.done %s262, 128
        $region40: #{tpu_custom_call.1} parent=35 // pred_fallthru
          _
      $region36: #{tpu_custom_call.1} parent=5 // pred_fallthru
        _
    $region6: #{tpu_custom_call.1} parent=1 // loop_footer
      %s15 = sadd.s32 1, %s11
    $region7: #{tpu_custom_call.1} parent=1 // loop_footer_branch
      %10 = sbr.rel target = $region3
    $region8: #{tpu_custom_call.1} parent=1 // loop_exit
      _
    %268 = vsyncpa [#allocation3], 1
    %s269 = scalar_lea.sflag [#allocation3], 1
    %270 = vsyncpa %s269, 1

</llo_original>
